<compile_context>
chip_gen: v7x
topology: tpu7x:2x2x1
jax: 0.10.0
libtpu: 0.0.40
codegen_flags: <defaults>
</compile_context>

<pallas_src>
import functools
from math import prod

import jax
import jax.numpy as jnp
from jax import lax
from jax.experimental import pallas as pl
from jax.experimental.pallas import tpu as pltpu

_LANE = 128
_MAX_TILE_BYTES = 4 * 1024 * 1024        # per pipeline buffer (double-buffered)
_VMEM_LIMIT_BYTES = 32 * 1024 * 1024     # safe on v5e/v6e/v7x, covers our tiles
_MIN_KERNEL_ELEMS = 4096                 # below this, XLA's fused reduce wins


def _round_up(a: int, b: int) -> int:
    return ((a + b - 1) // b) * b


def _sublanes(dtype) -> int:
    # Native sublane packing: 8 for 32-bit, 16 for 16-bit, 32 for 8-bit dtypes.
    itemsize = jnp.dtype(dtype).itemsize
    return 8 * max(1, 4 // max(1, itemsize))


def _neutral_for(dtype):
    dt = jnp.dtype(dtype)
    if jnp.issubdtype(dt, jnp.floating):
        return float("-inf")
    if jnp.issubdtype(dt, jnp.integer):
        return int(jnp.iinfo(dt).min)
    return None  # bool / other -> jnp.max fast path


def _tree_max(chunks):
    """Pairwise (tree) fold of elementwise maxima -> short VPU dep chain."""
    while len(chunks) > 1:
        nxt = [jnp.maximum(a, b) for a, b in zip(chunks[::2], chunks[1::2])]
        if len(chunks) % 2:
            nxt.append(chunks[-1])
        chunks = nxt
    return chunks[0]


# ---------------------------------------------------------------------------
# Path A: reduce over the last (lane) axis of a 2-D view (M, N).
# ---------------------------------------------------------------------------
def _make_lane_max_kernel(tn: int, n_valid: int, neutral):
    n_chunks = tn // _LANE
    ragged = (n_valid % tn) != 0

    def kernel(x_ref, o_ref, acc_ref):
        k = pl.program_id(1)

        @pl.when(k == 0)
        def _():
            acc_ref[...] = jnp.full(acc_ref.shape, neutral, acc_ref.dtype)

        x = x_ref[...]                                   # (tm, tn)
        if ragged:
            # Mask lanes past the true reduction length (affects last k block).
            col = k * tn + lax.broadcasted_iota(jnp.int32, x.shape, 1)
            x = jnp.where(col < n_valid, x, neutral)

        # Deferred cross-lane reduce: fold 128-lane chunks elementwise (VPU).
        m = _tree_max([x[:, c * _LANE:(c + 1) * _LANE] for c in range(n_chunks)])
        acc_ref[...] = jnp.maximum(acc_ref[...], m)

        @pl.when(k == pl.num_programs(1) - 1)
        def _():
            # Single XLU lane-reduce per row block, only in the epilogue.
            o_ref[...] = jnp.max(acc_ref[...], axis=-1, keepdims=True).astype(
                o_ref.dtype)

    return kernel


def _max_over_lanes(x2d: jax.Array) -> jax.Array:
    """Max over the last axis of a 2-D array (M, N), N >= 128."""
    M, N = x2d.shape
    dt = x2d.dtype
    itemsize = jnp.dtype(dt).itemsize
    sub = _sublanes(dt)
    neutral = _neutral_for(dt)

    # Reduction-axis tile: always a multiple of 128, up to 2048 lanes.
    tn = min(2048, _round_up(N, _LANE))
    # Row tile: multiple of the native sublane count, VMEM-budgeted.
    tm_cap = max(sub, (_MAX_TILE_BYTES // (tn * itemsize)) // sub * sub)
    tm = min(512, tm_cap, _round_up(M, sub))
    # Give the "parallel" row axis >= 2 blocks when possible (v7x: 2 TCs).
    if M > sub and pl.cdiv(M, tm) < 2:
        tm = max(sub, _round_up(pl.cdiv(M, 2), sub))
    n_i = pl.cdiv(M, tm)
    n_k = pl.cdiv(N, tn)

    out = pl.pallas_call(
        _make_lane_max_kernel(tn=tn, n_valid=N, neutral=neutral),
        # Output padded to whole row blocks (tiny) so no partial output writes.
        out_shape=jax.ShapeDtypeStruct((n_i * tm, 1), dt),
        grid_spec=pltpu.PrefetchScalarGridSpec(
            num_scalar_prefetch=0,
            grid=(n_i, n_k),
            in_specs=[pl.BlockSpec((tm, tn), lambda i, k: (i, k))],
            out_specs=pl.BlockSpec((tm, 1), lambda i, k: (i, 0)),
            scratch_shapes=[pltpu.VMEM((tm, _LANE), dt)],
        ),
        compiler_params=pltpu.CompilerParams(
            dimension_semantics=("parallel", "arbitrary"),
            vmem_limit_bytes=_VMEM_LIMIT_BYTES,
        ),
    )(x2d)
    return out[:M, 0]


# ---------------------------------------------------------------------------
# Path B: reduce over the middle (sublane) axis of a 3-D view (pre, P, post).
# Keeps the native layout (no transpose) and gives a lane-dense output.
# ---------------------------------------------------------------------------
def _make_sublane_max_kernel(tp: int, sub: int, p_valid: int, neutral):
    n_chunks = tp // sub
    ragged = (p_valid % tp) != 0

    def kernel(x_ref, o_ref, acc_ref):
        k = pl.program_id(2)

        @pl.when(k == 0)
        def _():
            acc_ref[...] = jnp.full(acc_ref.shape, neutral, acc_ref.dtype)

        x = x_ref[0]                                     # (tp, tpost)
        if ragged:
            # Mask sublanes past the true pooled length (affects last k block).
            row = k * tp + lax.broadcasted_iota(jnp.int32, x.shape, 0)
            x = jnp.where(row < p_valid, x, neutral)

        # Fold sublane chunks elementwise (pure VPU, packing-aligned).
        m = _tree_max([x[c * sub:(c + 1) * sub, :] for c in range(n_chunks)])
        acc_ref[...] = jnp.maximum(acc_ref[...], m)

        @pl.when(k == pl.num_programs(2) - 1)
        def _():
            # One small sublane reduce in the epilogue; lane-dense store.
            o_ref[...] = jnp.max(acc_ref[...], axis=0, keepdims=True).astype(
                o_ref.dtype)

    return kernel


def _max_over_sublanes(x3d: jax.Array) -> jax.Array:
    """Max over axis 1 of a 3-D array (pre, P, post), post >= 128."""
    pre, P, post = x3d.shape
    dt = x3d.dtype
    itemsize = jnp.dtype(dt).itemsize
    sub = _sublanes(dt)
    neutral = _neutral_for(dt)

    tpost = min(2048, _round_up(post, _LANE))
    tp_cap = max(sub, (_MAX_TILE_BYTES // (tpost * itemsize)) // sub * sub)
    tp = min(512, tp_cap, _round_up(P, sub))
    n_j = pl.cdiv(post, tpost)
    n_k = pl.cdiv(P, tp)

    out = pl.pallas_call(
        _make_sublane_max_kernel(tp=tp, sub=sub, p_valid=P, neutral=neutral),
        # Output lane-padded to whole tpost tiles (tiny), sliced afterwards.
        out_shape=jax.ShapeDtypeStruct((pre, n_j * tpost), dt),
        grid_spec=pltpu.PrefetchScalarGridSpec(
            num_scalar_prefetch=0,
            grid=(pre, n_j, n_k),
            in_specs=[pl.BlockSpec((1, tp, tpost), lambda b, j, k: (b, k, j))],
            out_specs=pl.BlockSpec((1, tpost), lambda b, j, k: (b, j)),
            scratch_shapes=[pltpu.VMEM((sub, tpost), dt)],
        ),
        compiler_params=pltpu.CompilerParams(
            dimension_semantics=("parallel", "parallel", "arbitrary"),
            vmem_limit_bytes=_VMEM_LIMIT_BYTES,
        ),
    )(x3d)
    return out[:, :post]


# ---------------------------------------------------------------------------
# Public wrapper: equivalent of GlobalMaxPool(dim, keepdim).forward(x).
# ---------------------------------------------------------------------------
def global_max_pool(x: jax.Array, dim: int = -1, keepdim: bool = False) -> jax.Array:
    ndim = x.ndim
    d = dim % ndim
    P = x.shape[d]
    pre_shape = x.shape[:d]
    post_shape = x.shape[d + 1:]
    pre = int(prod(pre_shape)) if pre_shape else 1
    post = int(prod(post_shape)) if post_shape else 1

    neutral = _neutral_for(x.dtype)
    # Fast path: tiny problems or lane width < 128 (kernel would waste lanes).
    use_fast = (
        neutral is None
        or P <= 1
        or x.size < _MIN_KERNEL_ELEMS
        or (post == 1 and P < _LANE)
        or (post > 1 and post < _LANE)
    )
    if use_fast:
        return jnp.max(x, axis=d, keepdims=keepdim)

    if post == 1:
        # Pooled dim is (effectively) innermost: reduce over lanes.
        red = _max_over_lanes(x.reshape(pre, P))           # (pre,)
    else:
        # Pooled dim on sublanes, trailing dims on lanes: no transpose needed.
        red = _max_over_sublanes(x.reshape(pre, P, post))  # (pre, post)

    out = red.reshape(pre_shape + post_shape)
    if keepdim:
        out = jnp.expand_dims(out, d)
    return out


if __name__ == "__main__":
    key = jax.random.PRNGKey(0)
    k1, k2, k3, k4 = jax.random.split(key, 4)

    # 1) Pooled dim innermost -> lane-reduction kernel (path A).
    x1 = jax.random.normal(k1, (2, 4, 16, 256), dtype=jnp.float32)
    o1 = jax.jit(functools.partial(global_max_pool, dim=-1, keepdim=False))(x1)
    jax.block_until_ready(o1)
    assert o1.shape == (2, 4, 16) and o1.dtype == x1.dtype
    assert jnp.allclose(o1, jnp.max(x1, axis=-1))

    # 2) Pooled dim not innermost -> sublane-reduction kernel (path B), keepdim.
    x2 = jax.random.normal(k2, (2, 4, 32, 32), dtype=jnp.float32)
    o2 = jax.jit(functools.partial(global_max_pool, dim=1, keepdim=True))(x2)
    jax.block_until_ready(o2)
    assert o2.shape == (2, 1, 32, 32)
    assert jnp.allclose(o2, jnp.max(x2, axis=1, keepdims=True))

    # 3) Ragged rows + ragged reduction length (in-kernel masking, no jnp.pad).
    x3 = jax.random.normal(k3, (3, 5, 300), dtype=jnp.float32)
    o3 = jax.jit(functools.partial(global_max_pool, dim=-1))(x3)
    jax.block_until_ready(o3)
    assert o3.shape == (3, 5)
    assert jnp.allclose(o3, jnp.max(x3, axis=-1))

    # 4) Ragged pooled dim + ragged lane width on the sublane path.
    x4 = jax.random.normal(k4, (3, 7, 4, 70), dtype=jnp.float32)
    o4 = jax.jit(functools.partial(global_max_pool, dim=1))(x4)
    jax.block_until_ready(o4)
    assert o4.shape == (3, 4, 70)
    assert jnp.allclose(o4, jnp.max(x4, axis=1))

    # 5) bf16 stays in bf16 end-to-end (no f32 accumulation needed for max).
    x5 = x1.astype(jnp.bfloat16)
    o5 = jax.jit(functools.partial(global_max_pool, dim=-1))(x5)
    jax.block_until_ready(o5)
    assert o5.dtype == jnp.bfloat16
    assert jnp.allclose(o5.astype(jnp.float32),
                        jnp.max(x5, axis=-1).astype(jnp.float32))

    # 6) Tiny input takes the jnp.max fast path.
    x6 = jax.random.normal(k1, (2, 4, 16, 16), dtype=jnp.float32)
    o6 = jax.jit(functools.partial(global_max_pool, dim=-1))(x6)
    jax.block_until_ready(o6)
    assert jnp.allclose(o6, jnp.max(x6, axis=-1))

    print("KERNEL_OK")
</pallas_src>

<mosaic_0001>
module attributes {stable_mosaic.version = 11 : i64} {
  func.func @kernel(%arg0: i32, %arg1: i32, %arg2: memref<64x256xf32, #tpu.memory_space<vmem>>, %arg3: memref<64x1xf32, #tpu.memory_space<vmem>>, %arg4: memref<64x128xf32, #tpu.memory_space<vmem>>) attributes {dimension_semantics = [#tpu.dimension_semantics<parallel>, #tpu.dimension_semantics<arbitrary>], iteration_bounds = array<i64: 2, 1>, scalar_prefetch = 0 : i64, scratch_operands = 1 : i64, tpu.core_type = #tpu.core_type<tc>, window_params = [{transform_indices = @transform_0, window_bounds = array<i64: 64, 256>}, {transform_indices = @transform_1, window_bounds = array<i64: 64, 1>}]} {
    %c0_i32 = arith.constant 0 : i32
    %0 = arith.cmpi eq, %arg1, %c0_i32 : i32
    %1 = arith.extui %0 : i1 to i32
    %c0_i32_0 = arith.constant 0 : i32
    %2 = arith.cmpi ne, %1, %c0_i32_0 : i32
    scf.if %2 {
      %cst = arith.constant 0xFF800000 : f32
      %13 = vector.broadcast %cst : f32 to vector<64x128xf32>
      %c0_8 = arith.constant 0 : index
      %c0_9 = arith.constant 0 : index
      %14 = vector.load %arg4[%c0_8, %c0_9] : memref<64x128xf32, #tpu.memory_space<vmem>>, vector<64x128xf32>
      tpu.vector_store %arg4[%c0_8, %c0_9], %13 {strides = array<i32>} : memref<64x128xf32, #tpu.memory_space<vmem>>, vector<64x128xf32>,
    } else {
    }
    %c0 = arith.constant 0 : index
    %c0_1 = arith.constant 0 : index
    %3 = vector.load %arg2[%c0, %c0_1] : memref<64x256xf32, #tpu.memory_space<vmem>>, vector<64x256xf32>
    %4 = vector.extract_strided_slice %3 {offsets = [0, 0], sizes = [64, 128], strides = [1, 1]} : vector<64x256xf32> to vector<64x128xf32>
    %5 = vector.extract_strided_slice %3 {offsets = [0, 128], sizes = [64, 128], strides = [1, 1]} : vector<64x256xf32> to vector<64x128xf32>
    %6 = arith.maximumf %4, %5 : vector<64x128xf32>
    %c0_2 = arith.constant 0 : index
    %c0_3 = arith.constant 0 : index
    %7 = vector.load %arg4[%c0_2, %c0_3] : memref<64x128xf32, #tpu.memory_space<vmem>>, vector<64x128xf32>
    %8 = arith.maximumf %7, %6 : vector<64x128xf32>
    %c0_4 = arith.constant 0 : index
    %c0_5 = arith.constant 0 : index
    %9 = vector.load %arg4[%c0_4, %c0_5] : memref<64x128xf32, #tpu.memory_space<vmem>>, vector<64x128xf32>
    tpu.vector_store %arg4[%c0_4, %c0_5], %8 {strides = array<i32>} : memref<64x128xf32, #tpu.memory_space<vmem>>, vector<64x128xf32>,
    %c0_i32_6 = arith.constant 0 : i32
    %10 = arith.cmpi eq, %arg1, %c0_i32_6 : i32
    %11 = arith.extui %10 : i1 to i32
    %c0_i32_7 = arith.constant 0 : i32
    %12 = arith.cmpi ne, %11, %c0_i32_7 : i32
    scf.if %12 {
      %c0_8 = arith.constant 0 : index
      %c0_9 = arith.constant 0 : index
      %13 = vector.load %arg4[%c0_8, %c0_9] : memref<64x128xf32, #tpu.memory_space<vmem>>, vector<64x128xf32>
      %cst = arith.constant dense<0xFF800000> : vector<64xf32>
      %14 = vector.multi_reduction <maximumf>, %13, %cst [1] : vector<64x128xf32> to vector<64xf32>
      %15 = vector.shape_cast %14 : vector<64xf32> to vector<64x1xf32>
      %c0_10 = arith.constant 0 : index
      %c0_11 = arith.constant 0 : index
      %16 = vector.load %arg3[%c0_10, %c0_11] : memref<64x1xf32, #tpu.memory_space<vmem>>, vector<64x1xf32>
      tpu.vector_store %arg3[%c0_10, %c0_11], %15 {strides = array<i32>} : memref<64x1xf32, #tpu.memory_space<vmem>>, vector<64x1xf32>,
    } else {
    }
    return
  }
  func.func @transform_0(%arg0: i32, %arg1: i32) -> (i32, i32) {
    %c0_i32 = arith.constant 0 : i32
    return %arg0, %arg1 : i32, i32
  }
  func.func @transform_1(%arg0: i32, %arg1: i32) -> (i32, i32) {
    %c0_i32 = arith.constant 0 : i32
    %c0_i32_0 = arith.constant 0 : i32
    return %arg0, %c0_i32 : i32, i32
  }
}

</mosaic_0001>

<llo_original>
// kernel: squeeze.1
$region0: #{squeeze.1}
  %s0 = inlined_call_operand.vmem [shape: f32[128], index: 0, kind: input, shape index: {}]
  %s1 = inlined_call_operand.hbm [shape: f32[2,4,16], index: 1, kind: output, shape index: {}]
  $region1: #{squeeze.1} parent=0
    #allocation0 [shape = 'u8[4096]{0}', space=vmem, size = 0x1000, scoped, tag = 'operand span for operand 1']
    #allocation1 [shape = 's32[1]{0}', space=sflag, size = 0x4, scoped, tag = 'scoped memory for squeeze.1']
    #allocation2 [shape = 'u8[8192]{0}', space=vmem, size = 0x2000, scoped, tag = 'scoped mem for output reshape']
    #allocation3 [shape = 'u8[4096]{0}', space=vmem, size = 0x1000, scoped, tag = 'scoped mem for input reshape']
    %2 = vsyncpa [#allocation1], 0
    %s4 = sshllo.u32 0, 1
    %v5 = vld [vmem:[%s0] sm:%s4]
    %6 = vst [vmem:[#allocation3] sm:%s4] %v5
    %v7 = vld [vmem:[#allocation3] sm:$0x1]
    %vm8 = vcmask 130048
    %9 = vst.msk [vmem:[#allocation2] sm:$0x1] %vm8, %v7
    %v10 = vld [vmem:[#allocation3] sm:$0x1]
    %11 = vrot.lane.b32.xlu0 %v10, 112
    %v12 = vpop.permute.xlu0 %11
    %vm13 = vcmask 130048
    %s14 = scalar_lea.vmem [#allocation2], 1
    %15 = vst.msk [vmem:[%s14] sm:$0x1] %vm13, %v12
    %v16 = vld [vmem:[#allocation3] sm:$0x1]
    %17 = vrot.lane.b32.xlu0 %v16, 96
    %v18 = vpop.permute.xlu0 %17
    %vm19 = vcmask 130048
    %s20 = scalar_lea.vmem [#allocation2], 2
    %21 = vst.msk [vmem:[%s20] sm:$0x1] %vm19, %v18
    %v22 = vld [vmem:[#allocation3] sm:$0x1]
    %23 = vrot.lane.b32.xlu0 %v22, 80
    %v24 = vpop.permute.xlu0 %23
    %vm25 = vcmask 130048
    %s26 = scalar_lea.vmem [#allocation2], 3
    %27 = vst.msk [vmem:[%s26] sm:$0x1] %vm25, %v24
    %v28 = vld [vmem:[#allocation3] sm:$0x1]
    %29 = vrot.lane.b32.xlu0 %v28, 64
    %v30 = vpop.permute.xlu0 %29
    %vm31 = vcmask 130048
    %s32 = scalar_lea.vmem [#allocation2], 8
    %33 = vst.msk [vmem:[%s32] sm:$0x1] %vm31, %v30
    %v34 = vld [vmem:[#allocation3] sm:$0x1]
    %35 = vrot.lane.b32.xlu0 %v34, 48
    %v36 = vpop.permute.xlu0 %35
    %vm37 = vcmask 130048
    %s38 = scalar_lea.vmem [#allocation2], 9
    %39 = vst.msk [vmem:[%s38] sm:$0x1] %vm37, %v36
    %v40 = vld [vmem:[#allocation3] sm:$0x1]
    %41 = vrot.lane.b32.xlu0 %v40, 32
    %v42 = vpop.permute.xlu0 %41
    %vm43 = vcmask 130048
    %s44 = scalar_lea.vmem [#allocation2], 10
    %45 = vst.msk [vmem:[%s44] sm:$0x1] %vm43, %v42
    %v46 = vld [vmem:[#allocation3] sm:$0x1]
    %47 = vrot.lane.b32.xlu0 %v46, 16
    %v48 = vpop.permute.xlu0 %47
    %vm49 = vcmask 130048
    %s50 = scalar_lea.vmem [#allocation2], 11
    %51 = vst.msk [vmem:[%s50] sm:$0x1] %vm49, %v48
    %s53 = sshllo.u32 0, 4
    %v55 = vld [vmem:[#allocation2] sm:%s53]
    %s56 = sshllo.u32 0, 4
    %57 = vst [vmem:[#allocation0] sm:%s56] %v55
    %s58 = scalar_lea.vmem [#allocation2], 8
    %v59 = vld [vmem:[%s58] sm:%s53]
    %s60 = sshllo.u32 0, 4
    %s61 = scalar_lea.vmem [#allocation0], 4
    %62 = vst [vmem:[%s61] sm:%s60] %v59
    %s64 = ssub.s32 128, 128
    %65 = vsyncadd [#allocation1], %s64
    %s67 = sshll.u32 [#allocation0], 4
    %s68 = int_to_ptr.vmem [resolvable:$true] %s67
    %70 = dma.vmem_to_hbm [thread:$0]  %s68, 128, %s1, [#allocation1]
    %71 = dma.done [#allocation1], 128
    %72 = vsyncpa [#allocation1], 1

// kernel: global_max_pool.1
$region0: #{global_max_pool.1}
  #allocation0 [shape = 'u32[]', space=smem, size = 0x4, offset = 0x4, fixed_abs, tag = 'smem constant byte address 0x4 - core index']
  #allocation1 [shape = 'u32[144,128]{1,0:T(1,128)}', space=vmem, size = 0x12000, scoped, tag = 'internal scratch']
  #allocation2 [shape = 'f32[64,128]{1,0:T(8,128)}', space=vmem, size = 0x8000, scoped, tag = 'scratch operand']
  %s0 = inlined_call_operand.hbm [shape: f32[128,256], index: 0, kind: input, shape index: {}]
  %s1 = inlined_call_operand.vmem [shape: f32[128,1], index: 1, kind: output, shape index: {}]
  %s2 = sld [smem:[#allocation0]]
  $region49: #{global_max_pool.1} parent=0
    _
  %s4 = ssub.s32 1, %s2
  %s5 = scalar_select 0, %s4, %s2
  $region1: #{global_max_pool.1} parent=0
    #allocation3 [shape = 'u8[131072]{0}', space=vmem, size = 0x20000, scoped, tag = 'input window, operand 0']
    #allocation4 [shape = 's32[2]{0}', space=sflag, size = 0x8, scoped, tag = 'scoped memory for global_max_pool.1']
    %6 = vsyncpa [#allocation4], 0
    %s7 = scalar_lea.sflag [#allocation4], 1
    %8 = vsyncpa %s7, 0
    loop: start=0, step=1, limit=4
    $region2: #{global_max_pool.1} parent=1 // loop_pre_header
      _
    $region3: #{global_max_pool.1} parent=1 // loop_header
      %s10 = sphi 0, %s14
      %p11 = scmp.ge.s32.totalorder %s10, 4
      %s17 = sphi 0, %s29
      %s18 = sphi 0, %s25
      %s19 = sphi 0, %s17
      %s20 = sphi 0, %s18
      %s21 = sphi 0, %s19
      %s22 = sphi 0, %s20
      %s34 = sphi 0, %s36
      %s37 = sphi 0, %s34
      %s38 = sphi 0, %s37
      %s54 = sphi 0, %s38
      %s60 = sphi 0, %s62
      %s63 = sphi 0, %s60
      %s64 = sphi 0, %s63
      %s80 = sphi 0, %s64
    $region4: #{global_max_pool.1} parent=1 // loop_header_branch
      %13 = sbr.rel (%p11) target = $region8
    $region5: #{global_max_pool.1} parent=1 // loop_body
      %s15 = ssub.s32 %s10, 1
      %s16 = ssub.s32 %s10, 2
      %s23 = sadd.s32 1, %s18
      %p24 = scmp.ge.s32.totalorder %s23, 1
      %s25 = scalar_select %p24, 0, %s23
      %s26 = sadd.s32 1, %s17
      %s27 = scalar_select %p24, %s26, %s17
      %p28 = scmp.ge.s32.totalorder %s27, 2
      %s29 = scalar_select %p28, 0, %s27
      %s30 = ssub.s32 %s17, %s29
      %s31 = ssub.s32 %s18, %s25
      %s32 = sor.u32 %s30, %s31
      %p33 = scmp.eq.s32.totalorder %s32, 0
      %s35 = sadd.s32 %s34, 1
      %s36 = scalar_select %p33, %s34, %s35
      %p39 = pneg %p33
      %p40 = scmp.eq.s32.totalorder %s10, 1
      %p41 = por %p39, %p40
      %p42 = scmp.ne.s32.totalorder %s34, %s37
      %p43 = scmp.eq.s32.totalorder %s10, 0
      %p44 = por %p42, %p43
      %p45 = scmp.ne.s32.totalorder %s34, %s37
      %p46 = scmp.eq.s32.totalorder %s15, 1
      %p47 = por %p45, %p46
      %p48 = scmp.ne.s32.totalorder %s37, %s38
      %p49 = scmp.eq.s32.totalorder %s15, 0
      %p50 = por %p48, %p49
      %p51 = scmp.ne.s32.totalorder %s37, %s38
      %p52 = scmp.eq.s32.totalorder %s16, 1
      %p53 = por %p51, %p52
      %p55 = scmp.ne.s32.totalorder %s38, %s54
      %p56 = scmp.eq.s32.totalorder %s16, 0
      %p57 = por %p55, %p56
      %s58 = ssub.s32 %s17, %s29
      %p59 = scmp.eq.s32.totalorder %s58, 0
      %s61 = sadd.s32 %s60, 1
      %s62 = scalar_select %p59, %s60, %s61
      %p65 = pneg %p59
      %p66 = scmp.eq.s32.totalorder %s10, 1
      %p67 = por %p65, %p66
      %p68 = scmp.ne.s32.totalorder %s60, %s63
      %p69 = scmp.eq.s32.totalorder %s10, 0
      %p70 = por %p68, %p69
      %p71 = scmp.ne.s32.totalorder %s60, %s63
      %p72 = scmp.eq.s32.totalorder %s15, 1
      %p73 = por %p71, %p72
      %p74 = scmp.ne.s32.totalorder %s63, %s64
      %p75 = scmp.eq.s32.totalorder %s15, 0
      %p76 = por %p74, %p75
      %p77 = scmp.ne.s32.totalorder %s63, %s64
      %p78 = scmp.eq.s32.totalorder %s16, 1
      %p79 = por %p77, %p78
      %p81 = scmp.ne.s32.totalorder %s64, %s80
      %p82 = scmp.eq.s32.totalorder %s16, 0
      %p83 = por %p81, %p82
      %p84 = scmp.le.s32.totalorder 1, %s10
      %p85 = scmp.lt.s32.totalorder %s10, 3
      %p86 = pnand %p84, %p85
      %p87 = pneg %p86
      // Predicated region
      $region9: #{global_max_pool.1} parent=5 // pred_check
        _
      $region10: #{global_max_pool.1} parent=5 // pred_check_branch
        %89 = sbr.rel (%p86) target = $region12
      $region11: #{global_max_pool.1} parent=5 // pred_region
        %s90 = ssub.s32 %s10, 1
      $region12: #{global_max_pool.1} parent=5 // pred_fallthru
        _
      %p91 = scmp.lt.s32.totalorder %s10, 2
      // Predicated region
      $region13: #{global_max_pool.1} parent=5 // pred_check
        %p92 = pneg %p91
      $region14: #{global_max_pool.1} parent=5 // pred_check_branch
        %94 = sbr.rel (%p92) target = $region16
      $region15: #{global_max_pool.1} parent=5 // pred_region
        // Predicated region
        $region17: #{global_max_pool.1} parent=15 // pred_check
          %p95 = pneg %p44
        $region18: #{global_max_pool.1} parent=15 // pred_check_branch
          %97 = sbr.rel (%p95) target = $region20
        $region19: #{global_max_pool.1} parent=15 // pred_region
          %s98 = sand.u32 %s34, 1
          %s99 = scalar_lea.sflag [#allocation4], %s98
          %s100 = sand.u32 %s34, 1
          %s101 = smul.addr %s100, 128
          %s102 = scalar_lea.vmem [#allocation3], %s101
          %s103 = smul.u32 8, %s17
          %s104 = smul.u32 2, %s18
          %s106 = ssub.s32 2048, 2048
          %107 = vsyncadd %s99, %s106
          %s108 = smul.addr %s103, 2
          %s109 = sadd.s32 %s104, %s108
          %s110 = smul.addr %s109, 128
          %s111 = scalar_lea.hbm %s0, %s110
          %s112 = sshll.u32 %s102, 4
          %s113 = int_to_ptr.vmem [resolvable:$true] %s112
          %118 = dma.hbm_to_vmem [thread:$0]  %s111, 2048, %s113, %s99, 256, 256, 16
        $region20: #{global_max_pool.1} parent=15 // pred_fallthru
          _
      $region16: #{global_max_pool.1} parent=5 // pred_fallthru
        _
      %p119 = scmp.le.s32.totalorder 1, %s10
      %p120 = scmp.lt.s32.totalorder %s10, 3
      %p121 = pnand %p119, %p120
      %p122 = pneg %p121
      // Predicated region
      $region21: #{global_max_pool.1} parent=5 // pred_check
        _
      $region22: #{global_max_pool.1} parent=5 // pred_check_branch
        %124 = sbr.rel (%p121) target = $region24
      $region23: #{global_max_pool.1} parent=5 // pred_region
        %s125 = ssub.s32 %s10, 1
        %s126 = sand.u32 %s37, 1
        %s127 = scalar_lea.sflag [#allocation4], %s126
        %s128 = sand.u32 %s37, 1
        %s129 = smul.addr %s128, 128
        %s130 = scalar_lea.vmem [#allocation3], %s129
        // Predicated region
        $region25: #{global_max_pool.1} parent=23 // pred_check
          %p131 = pneg %p50
        $region26: #{global_max_pool.1} parent=23 // pred_check_branch
          %133 = sbr.rel (%p131) target = $region28
        $region27: #{global_max_pool.1} parent=23 // pred_region
          %134 = dma.done %s127, 2048
        $region28: #{global_max_pool.1} parent=23 // pred_fallthru
          _
        %s135 = sand.u32 %s37, 1
        %s136 = scalar_lea.sflag [#allocation4], %s135
        %s137 = sand.u32 %s37, 1
        %s138 = smul.addr %s137, 128
        %s139 = scalar_lea.vmem [#allocation3], %s138
        %p140 = pneg %p50
        %p141 = pneg %p47
        %p142 = pneg %p76
        %p143 = pneg %p73
        %s144 = smul.u32 8, %s19
        %p145 = scmp.lt.s32.totalorder %s144, 15
        %s146 = scalar_select %p145, %s144, 15
        %s147 = smul.addr %s146, 8
        %s148 = scalar_lea.vmem %s1, %s147
        %s149 = smul.u32 8, %s19
        %s150 = smul.u32 2, %s20
        %s151 = smul.u32 8, %s19
        %p152 = scmp.lt.s32.totalorder %s151, 15
        %s153 = scalar_select %p152, %s151, 15
        %s154 = smul.addr %s153, 8
        %s155 = scalar_lea.vmem %s1, %s154
        %s156 = smul.u32 8, %s19
        %p157 = scmp.eq.s32.totalorder %s20, 0
        // Predicated region
        $region29: #{global_max_pool.1} parent=23 // pred_check
          %p158 = pneg %p157
        $region30: #{global_max_pool.1} parent=23 // pred_check_branch
          %160 = sbr.rel (%p158) target = $region32
        $region31: #{global_max_pool.1} parent=23 // pred_region
          %161 = vst [vmem:[#allocation2] sm:$0xff] -inf
          %162 = vst [vmem:[#allocation2 + $0x8] sm:$0xff] -inf
          %163 = vst [vmem:[#allocation2 + $0x10] sm:$0xff] -inf
          %164 = vst [vmem:[#allocation2 + $0x18] sm:$0xff] -inf
          %165 = vst [vmem:[#allocation2 + $0x20] sm:$0xff] -inf
          %166 = vst [vmem:[#allocation2 + $0x28] sm:$0xff] -inf
          %167 = vst [vmem:[#allocation2 + $0x30] sm:$0xff] -inf
          %168 = vst [vmem:[#allocation2 + $0x38] sm:$0xff] -inf
        $region32: #{global_max_pool.1} parent=23 // pred_fallthru
          _
        %v169 = vld [vmem:[%s130] sm:$0xff]
        %v170 = vld [vmem:[%s130 + $0x8] sm:$0xff]
        %v171 = vld [vmem:[%s130 + $0x10] sm:$0xff]
        %v172 = vld [vmem:[%s130 + $0x18] sm:$0xff]
        %v173 = vld [vmem:[%s130 + $0x20] sm:$0xff]
        %v174 = vld [vmem:[%s130 + $0x28] sm:$0xff]
        %v175 = vld [vmem:[%s130 + $0x30] sm:$0xff]
        %v176 = vld [vmem:[%s130 + $0x38] sm:$0xff]
        %v177 = vld [vmem:[%s130 + $0x40] sm:$0xff]
        %v178 = vld [vmem:[%s130 + $0x48] sm:$0xff]
        %v179 = vld [vmem:[%s130 + $0x50] sm:$0xff]
        %v180 = vld [vmem:[%s130 + $0x58] sm:$0xff]
        %v181 = vld [vmem:[%s130 + $0x60] sm:$0xff]
        %v182 = vld [vmem:[%s130 + $0x68] sm:$0xff]
        %v183 = vld [vmem:[%s130 + $0x70] sm:$0xff]
        %v184 = vld [vmem:[%s130 + $0x78] sm:$0xff]
        %v185 = vmax.f32 %v169, %v170
        %v186 = vmax.f32 %v171, %v172
        %v187 = vmax.f32 %v173, %v174
        %v188 = vmax.f32 %v175, %v176
        %v189 = vmax.f32 %v177, %v178
        %v190 = vmax.f32 %v179, %v180
        %v191 = vmax.f32 %v181, %v182
        %v192 = vmax.f32 %v183, %v184
        %v193 = vld [vmem:[#allocation2] sm:$0xff]
        %v194 = vld [vmem:[#allocation2 + $0x8] sm:$0xff]
        %v195 = vld [vmem:[#allocation2 + $0x10] sm:$0xff]
        %v196 = vld [vmem:[#allocation2 + $0x18] sm:$0xff]
        %v197 = vld [vmem:[#allocation2 + $0x20] sm:$0xff]
        %v198 = vld [vmem:[#allocation2 + $0x28] sm:$0xff]
        %v199 = vld [vmem:[#allocation2 + $0x30] sm:$0xff]
        %v200 = vld [vmem:[#allocation2 + $0x38] sm:$0xff]
        %v201 = vmax.f32 %v193, %v185
        %v202 = vmax.f32 %v194, %v186
        %v203 = vmax.f32 %v195, %v187
        %v204 = vmax.f32 %v196, %v188
        %v205 = vmax.f32 %v197, %v189
        %v206 = vmax.f32 %v198, %v190
        %v207 = vmax.f32 %v199, %v191
        %v208 = vmax.f32 %v200, %v192
        %209 = vst [vmem:[#allocation2] sm:$0xff] %v201
        %210 = vst [vmem:[#allocation2 + $0x8] sm:$0xff] %v202
        %211 = vst [vmem:[#allocation2 + $0x10] sm:$0xff] %v203
        %212 = vst [vmem:[#allocation2 + $0x18] sm:$0xff] %v204
        %213 = vst [vmem:[#allocation2 + $0x20] sm:$0xff] %v205
        %214 = vst [vmem:[#allocation2 + $0x28] sm:$0xff] %v206
        %215 = vst [vmem:[#allocation2 + $0x30] sm:$0xff] %v207
        %216 = vst [vmem:[#allocation2 + $0x38] sm:$0xff] %v208
        // Predicated region
        $region33: #{global_max_pool.1} parent=23 // pred_check
          %p217 = pneg %p157
        $region34: #{global_max_pool.1} parent=23 // pred_check_branch
          %219 = sbr.rel (%p217) target = $region36
        $region35: #{global_max_pool.1} parent=23 // pred_region
          %v220 = vld [vmem:[#allocation2] sm:$0xff]
          %v221 = vld [vmem:[#allocation2 + $0x8] sm:$0xff]
          %v222 = vld [vmem:[#allocation2 + $0x10] sm:$0xff]
          %v223 = vld [vmem:[#allocation2 + $0x18] sm:$0xff]
          %v224 = vld [vmem:[#allocation2 + $0x20] sm:$0xff]
          %v225 = vld [vmem:[#allocation2 + $0x28] sm:$0xff]
          %v226 = vld [vmem:[#allocation2 + $0x30] sm:$0xff]
          %v227 = vld [vmem:[#allocation2 + $0x38] sm:$0xff]
          %228 = vmax.xlane.f32.xlu0 %v220
          %v229 = vpop.xlane.xlu0 %228
          %230 = vmax.xlane.f32.xlu0 %v221
          %v231 = vpop.xlane.xlu0 %230
          %232 = vmax.xlane.f32.xlu0 %v222
          %v233 = vpop.xlane.xlu0 %232
          %234 = vmax.xlane.f32.xlu0 %v223
          %v235 = vpop.xlane.xlu0 %234
          %236 = vmax.xlane.f32.xlu0 %v224
          %v237 = vpop.xlane.xlu0 %236
          %238 = vmax.xlane.f32.xlu0 %v225
          %v239 = vpop.xlane.xlu0 %238
          %240 = vmax.xlane.f32.xlu0 %v226
          %v241 = vpop.xlane.xlu0 %240
          %242 = vmax.xlane.f32.xlu0 %v227
          %v243 = vpop.xlane.xlu0 %242
          %vm244 = vcmask 7168
          %245 = vst.msk [vmem:[%s155] sm:$0xff] %vm244, %v229
          %246 = vst.msk [vmem:[%s155 + $0x8] sm:$0xff] %vm244, %v231
          %247 = vst.msk [vmem:[%s155 + $0x10] sm:$0xff] %vm244, %v233
          %248 = vst.msk [vmem:[%s155 + $0x18] sm:$0xff] %vm244, %v235
          %249 = vst.msk [vmem:[%s155 + $0x20] sm:$0xff] %vm244, %v237
          %250 = vst.msk [vmem:[%s155 + $0x28] sm:$0xff] %vm244, %v239
          %251 = vst.msk [vmem:[%s155 + $0x30] sm:$0xff] %vm244, %v241
          %252 = vst.msk [vmem:[%s155 + $0x38] sm:$0xff] %vm244, %v243
        $region36: #{global_max_pool.1} parent=23 // pred_fallthru
          _
        %s253 = smul.u32 8, %s19
        %p254 = scmp.lt.s32.totalorder %s253, 15
        %s255 = scalar_select %p254, %s253, 15
        %s256 = smul.addr %s255, 8
        %s257 = scalar_lea.vmem %s1, %s256
        // Predicated region
        $region37: #{global_max_pool.1} parent=23 // pred_check
          %p258 = pneg %p73
        $region38: #{global_max_pool.1} parent=23 // pred_check_branch
          %260 = sbr.rel (%p258) target = $region40
        $region39: #{global_max_pool.1} parent=23 // pred_region
          %s261 = smul.u32 8, %s19
        $region40: #{global_max_pool.1} parent=23 // pred_fallthru
          _
      $region24: #{global_max_pool.1} parent=5 // pred_fallthru
        _
      %p262 = scmp.le.s32.totalorder 2, %s10
      // Predicated region
      $region41: #{global_max_pool.1} parent=5 // pred_check
        %p263 = pneg %p262
      $region42: #{global_max_pool.1} parent=5 // pred_check_branch
        %265 = sbr.rel (%p263) target = $region44
      $region43: #{global_max_pool.1} parent=5 // pred_region
        %s266 = ssub.s32 %s10, 2
        // Predicated region
        $region45: #{global_max_pool.1} parent=43 // pred_check
          %p267 = pneg %p79
        $region46: #{global_max_pool.1} parent=43 // pred_check_branch
          %269 = sbr.rel (%p267) target = $region48
        $region47: #{global_max_pool.1} parent=43 // pred_region
          %s270 = smul.u32 8, %s21
          %p271 = scmp.lt.s32.totalorder %s270, 15
          %s272 = scalar_select %p271, %s270, 15
          %s273 = smul.addr %s272, 8
          %s274 = scalar_lea.vmem %s1, %s273
        $region48: #{global_max_pool.1} parent=43 // pred_fallthru
          _
      $region44: #{global_max_pool.1} parent=5 // pred_fallthru
        _
    $region6: #{global_max_pool.1} parent=1 // loop_footer
      %s14 = sadd.s32 1, %s10
    $region7: #{global_max_pool.1} parent=1 // loop_footer_branch
      %9 = sbr.rel target = $region3
    $region8: #{global_max_pool.1} parent=1 // loop_exit
      _
    %275 = vsyncpa [#allocation4], 1
    %s276 = scalar_lea.sflag [#allocation4], 1
    %277 = vsyncpa %s276, 1

</llo_original>
